<compile_context>
chip_gen: v5e
topology: v5e:2x2
jax: 0.10.0
libtpu: 0.0.40
codegen_flags: <defaults>
</compile_context>

<pallas_src>
import functools

import jax
import jax.numpy as jnp
from jax import lax
from jax.experimental import pallas as pl
from jax.experimental.pallas import tpu as pltpu

BN_EPS = 1e-5
LANE = 128      # lane width: pad feature dims to a multiple of this
SUBLANE = 8     # f32 sublane count: rows of the stacked small-vector input


def _round_up(n, m):
    return ((n + m - 1) // m) * m


def _param_embed_kernel(x_ref, w1_ref, w2_ref, w3_ref, vecs_ref, out_ref):
    """Whole forward pass on one grid point (everything fits in VMEM).

    vecs_ref rows: 0=gamma1, 1=beta1, 2=gamma2, 3=beta2, 4=bias3, 5..7=pad.
    """
    x = x_ref[...].astype(jnp.float32)
    vecs = vecs_ref[...]
    g1, be1 = vecs[0:1, :], vecs[1:2, :]
    g2, be2 = vecs[2:3, :], vecs[3:4, :]
    b3 = vecs[4:5, :]

    def bn_relu(h, g, be):
        # Training-mode BatchNorm1d (biased batch variance), fused affine.
        mu = jnp.mean(h, axis=0, keepdims=True)
        var = jnp.mean(h * h, axis=0, keepdims=True) - mu * mu
        scale = g * lax.rsqrt(var + BN_EPS)          # rsqrt -> EUP slot
        shift = be - mu * scale
        return jnp.maximum(h * scale + shift, 0.0)

    # lin1 (bias omitted: cancelled by BN mean subtraction) + BN + ReLU
    h = jnp.dot(x, w1_ref[...], preferred_element_type=jnp.float32)
    h = bn_relu(h, g1, be1)

    # lin2 (bias omitted) + BN + ReLU
    h = jnp.dot(h, w2_ref[...], preferred_element_type=jnp.float32)
    h = bn_relu(h, g2, be2)

    # lin3 (bias kept)
    out = jnp.dot(h, w3_ref[...], preferred_element_type=jnp.float32) + b3
    out_ref[...] = out.astype(out_ref.dtype)


def init_params(key, nparams, dim):
    """PyTorch-shaped parameters (Linear weights stored transposed: (in, out))."""
    k1, k2, k3, k4, k5, k6 = jax.random.split(key, 6)

    def linear(kw, kb, fan_in, fan_out):
        bound = 1.0 / jnp.sqrt(fan_in)
        w = jax.random.uniform(kw, (fan_in, fan_out), jnp.float32, -bound, bound)
        b = jax.random.uniform(kb, (1, fan_out), jnp.float32, -bound, bound)
        return w, b

    w1, b1 = linear(k1, k2, nparams, dim)
    w2, b2 = linear(k3, k4, dim, dim)
    w3, b3 = linear(k5, k6, dim, dim)
    ones = jnp.ones((1, dim), jnp.float32)
    zeros = jnp.zeros((1, dim), jnp.float32)
    return dict(w1=w1, b1=b1, g1=ones, be1=zeros,
                w2=w2, b2=b2, g2=ones, be2=zeros,
                w3=w3, b3=b3)


def pack_params(p, nparams, dim):
    """One-time packing: pad feature dims to LANE multiples, stack the small
    per-feature vectors into a single (SUBLANE, dim_padded) array."""
    dpad = _round_up(dim, LANE)

    w1 = jnp.zeros((nparams, dpad), jnp.float32).at[:, :dim].set(p["w1"])
    w2 = jnp.zeros((dpad, dpad), jnp.float32).at[:dim, :dim].set(p["w2"])
    w3 = jnp.zeros((dpad, dpad), jnp.float32).at[:dim, :dim].set(p["w3"])

    vecs = jnp.zeros((SUBLANE, dpad), jnp.float32)
    vecs = vecs.at[0, :dim].set(p["g1"][0])
    vecs = vecs.at[1, :dim].set(p["be1"][0])
    vecs = vecs.at[2, :dim].set(p["g2"][0])
    vecs = vecs.at[3, :dim].set(p["be2"][0])
    vecs = vecs.at[4, :dim].set(p["b3"][0])
    # Padded gamma/beta columns are zero -> padded features stay exactly 0
    # through BN/ReLU/matmul, so real columns are unaffected.
    return dict(w1=w1, w2=w2, w3=w3, vecs=vecs)


@functools.partial(jax.jit, static_argnames=("dim",))
def param_embed_forward(x, packed, dim):
    """x: (B, nparams) float32.  packed: output of pack_params."""
    B, _ = x.shape
    dpad = packed["w1"].shape[1]

    def spec(shape):
        return pl.BlockSpec(shape, lambda: tuple(0 for _ in shape))

    args = (x, packed["w1"], packed["w2"], packed["w3"], packed["vecs"])
    in_specs = [spec(a.shape) for a in args]

    out_padded = pl.pallas_call(
        _param_embed_kernel,
        out_shape=jax.ShapeDtypeStruct((B, dpad), jnp.float32),
        in_specs=in_specs,
        out_specs=spec((B, dpad)),
        compiler_params=pltpu.CompilerParams(vmem_limit_bytes=32 << 20),
    )(*args)
    return out_padded[:, :dim]


def param_embed_reference(x, p):
    """Pure-JAX reference with full PyTorch semantics (incl. lin1/lin2 biases)."""
    h = x @ p["w1"] + p["b1"]
    mu = h.mean(0, keepdims=True)
    var = ((h - mu) ** 2).mean(0, keepdims=True)
    h = jnp.maximum((h - mu) / jnp.sqrt(var + BN_EPS) * p["g1"] + p["be1"], 0.0)
    h = h @ p["w2"] + p["b2"]
    mu = h.mean(0, keepdims=True)
    var = ((h - mu) ** 2).mean(0, keepdims=True)
    h = jnp.maximum((h - mu) / jnp.sqrt(var + BN_EPS) * p["g2"] + p["be2"], 0.0)
    return h @ p["w3"] + p["b3"]


if __name__ == "__main__":
    B, NPARAMS, DIM = 8, 16, 32
    key = jax.random.PRNGKey(0)
    kx, kp = jax.random.split(key)

    x = jax.random.normal(kx, (B, NPARAMS), jnp.float32)
    params = init_params(kp, NPARAMS, DIM)
    packed = pack_params(params, NPARAMS, DIM)

    out = param_embed_forward(x, packed, DIM)
    out = jax.block_until_ready(out)

    ref = param_embed_reference(x, params)
    assert out.shape == (B, DIM)
    assert jnp.allclose(out, ref, atol=1e-4, rtol=1e-4), "mismatch vs reference"
    print("KERNEL_OK")
</pallas_src>

<mosaic_0001>
module attributes {stable_mosaic.version = 11 : i64} {
  func.func @_param_embed_kernel(%arg0: memref<8x16xf32, #tpu.memory_space<vmem>>, %arg1: memref<16x128xf32, #tpu.memory_space<vmem>>, %arg2: memref<128x128xf32, #tpu.memory_space<vmem>>, %arg3: memref<128x128xf32, #tpu.memory_space<vmem>>, %arg4: memref<8x128xf32, #tpu.memory_space<vmem>>, %arg5: memref<8x128xf32, #tpu.memory_space<vmem>>) attributes {dimension_semantics = [], scalar_prefetch = 0 : i64, scratch_operands = 0 : i64, tpu.core_type = #tpu.core_type<tc>} {
    %c0 = arith.constant 0 : index
    %c0_0 = arith.constant 0 : index
    %0 = vector.load %arg0[%c0, %c0_0] : memref<8x16xf32, #tpu.memory_space<vmem>>, vector<8x16xf32>
    %c0_1 = arith.constant 0 : index
    %c0_2 = arith.constant 0 : index
    %1 = vector.load %arg4[%c0_1, %c0_2] : memref<8x128xf32, #tpu.memory_space<vmem>>, vector<8x128xf32>
    %2 = vector.extract_strided_slice %1 {offsets = [0, 0], sizes = [1, 128], strides = [1, 1]} : vector<8x128xf32> to vector<1x128xf32>
    %3 = vector.extract_strided_slice %1 {offsets = [1, 0], sizes = [1, 128], strides = [1, 1]} : vector<8x128xf32> to vector<1x128xf32>
    %4 = vector.extract_strided_slice %1 {offsets = [2, 0], sizes = [1, 128], strides = [1, 1]} : vector<8x128xf32> to vector<1x128xf32>
    %5 = vector.extract_strided_slice %1 {offsets = [3, 0], sizes = [1, 128], strides = [1, 1]} : vector<8x128xf32> to vector<1x128xf32>
    %6 = vector.extract_strided_slice %1 {offsets = [4, 0], sizes = [1, 128], strides = [1, 1]} : vector<8x128xf32> to vector<1x128xf32>
    %c0_3 = arith.constant 0 : index
    %c0_4 = arith.constant 0 : index
    %7 = vector.load %arg1[%c0_3, %c0_4] : memref<16x128xf32, #tpu.memory_space<vmem>>, vector<16x128xf32>
    %cst = arith.constant dense<0.000000e+00> : vector<8x128xf32>
    %8 = tpu.matmul %0, %7, %cst {dimension_numbers = #tpu.dot_dimension_numbers<[1], [0], [0], [1], [0, 0, 1, 1], [], []>} : vector<8x16xf32>, vector<16x128xf32>, vector<8x128xf32> -> vector<8x128xf32>
    %cst_5 = arith.constant dense<0.000000e+00> : vector<128xf32>
    %9 = vector.multi_reduction <add>, %8, %cst_5 [0] : vector<8x128xf32> to vector<128xf32>
    %10 = vector.shape_cast %9 : vector<128xf32> to vector<1x128xf32>
    %cst_6 = arith.constant 8.000000e+00 : f32
    %11 = vector.broadcast %cst_6 : f32 to vector<1x128xf32>
    %12 = arith.divf %10, %11 : vector<1x128xf32>
    %13 = arith.mulf %8, %8 : vector<8x128xf32>
    %cst_7 = arith.constant dense<0.000000e+00> : vector<128xf32>
    %14 = vector.multi_reduction <add>, %13, %cst_7 [0] : vector<8x128xf32> to vector<128xf32>
    %15 = vector.shape_cast %14 : vector<128xf32> to vector<1x128xf32>
    %cst_8 = arith.constant 8.000000e+00 : f32
    %16 = vector.broadcast %cst_8 : f32 to vector<1x128xf32>
    %17 = arith.divf %15, %16 : vector<1x128xf32>
    %18 = arith.mulf %12, %12 : vector<1x128xf32>
    %19 = arith.subf %17, %18 : vector<1x128xf32>
    %cst_9 = arith.constant 9.99999974E-6 : f32
    %20 = vector.broadcast %cst_9 : f32 to vector<1x128xf32>
    %21 = arith.addf %19, %20 : vector<1x128xf32>
    %22 = math.rsqrt %21 : vector<1x128xf32>
    %23 = arith.mulf %2, %22 : vector<1x128xf32>
    %24 = arith.mulf %12, %23 : vector<1x128xf32>
    %25 = arith.subf %3, %24 : vector<1x128xf32>
    %26 = vector.broadcast %23 : vector<1x128xf32> to vector<8x128xf32>
    %27 = arith.mulf %8, %26 : vector<8x128xf32>
    %28 = vector.broadcast %25 : vector<1x128xf32> to vector<8x128xf32>
    %29 = arith.addf %27, %28 : vector<8x128xf32>
    %cst_10 = arith.constant 0.000000e+00 : f32
    %30 = vector.broadcast %cst_10 : f32 to vector<8x128xf32>
    %31 = arith.maximumf %29, %30 : vector<8x128xf32>
    %c0_11 = arith.constant 0 : index
    %c0_12 = arith.constant 0 : index
    %32 = vector.load %arg2[%c0_11, %c0_12] : memref<128x128xf32, #tpu.memory_space<vmem>>, vector<128x128xf32>
    %cst_13 = arith.constant dense<0.000000e+00> : vector<8x128xf32>
    %33 = tpu.matmul %31, %32, %cst_13 {dimension_numbers = #tpu.dot_dimension_numbers<[1], [0], [0], [1], [0, 0, 1, 1], [], []>} : vector<8x128xf32>, vector<128x128xf32>, vector<8x128xf32> -> vector<8x128xf32>
    %cst_14 = arith.constant dense<0.000000e+00> : vector<128xf32>
    %34 = vector.multi_reduction <add>, %33, %cst_14 [0] : vector<8x128xf32> to vector<128xf32>
    %35 = vector.shape_cast %34 : vector<128xf32> to vector<1x128xf32>
    %cst_15 = arith.constant 8.000000e+00 : f32
    %36 = vector.broadcast %cst_15 : f32 to vector<1x128xf32>
    %37 = arith.divf %35, %36 : vector<1x128xf32>
    %38 = arith.mulf %33, %33 : vector<8x128xf32>
    %cst_16 = arith.constant dense<0.000000e+00> : vector<128xf32>
    %39 = vector.multi_reduction <add>, %38, %cst_16 [0] : vector<8x128xf32> to vector<128xf32>
    %40 = vector.shape_cast %39 : vector<128xf32> to vector<1x128xf32>
    %cst_17 = arith.constant 8.000000e+00 : f32
    %41 = vector.broadcast %cst_17 : f32 to vector<1x128xf32>
    %42 = arith.divf %40, %41 : vector<1x128xf32>
    %43 = arith.mulf %37, %37 : vector<1x128xf32>
    %44 = arith.subf %42, %43 : vector<1x128xf32>
    %cst_18 = arith.constant 9.99999974E-6 : f32
    %45 = vector.broadcast %cst_18 : f32 to vector<1x128xf32>
    %46 = arith.addf %44, %45 : vector<1x128xf32>
    %47 = math.rsqrt %46 : vector<1x128xf32>
    %48 = arith.mulf %4, %47 : vector<1x128xf32>
    %49 = arith.mulf %37, %48 : vector<1x128xf32>
    %50 = arith.subf %5, %49 : vector<1x128xf32>
    %51 = vector.broadcast %48 : vector<1x128xf32> to vector<8x128xf32>
    %52 = arith.mulf %33, %51 : vector<8x128xf32>
    %53 = vector.broadcast %50 : vector<1x128xf32> to vector<8x128xf32>
    %54 = arith.addf %52, %53 : vector<8x128xf32>
    %cst_19 = arith.constant 0.000000e+00 : f32
    %55 = vector.broadcast %cst_19 : f32 to vector<8x128xf32>
    %56 = arith.maximumf %54, %55 : vector<8x128xf32>
    %c0_20 = arith.constant 0 : index
    %c0_21 = arith.constant 0 : index
    %57 = vector.load %arg3[%c0_20, %c0_21] : memref<128x128xf32, #tpu.memory_space<vmem>>, vector<128x128xf32>
    %cst_22 = arith.constant dense<0.000000e+00> : vector<8x128xf32>
    %58 = tpu.matmul %56, %57, %cst_22 {dimension_numbers = #tpu.dot_dimension_numbers<[1], [0], [0], [1], [0, 0, 1, 1], [], []>} : vector<8x128xf32>, vector<128x128xf32>, vector<8x128xf32> -> vector<8x128xf32>
    %59 = vector.broadcast %6 : vector<1x128xf32> to vector<8x128xf32>
    %60 = arith.addf %58, %59 : vector<8x128xf32>
    %c0_23 = arith.constant 0 : index
    %c0_24 = arith.constant 0 : index
    %61 = vector.load %arg5[%c0_23, %c0_24] : memref<8x128xf32, #tpu.memory_space<vmem>>, vector<8x128xf32>
    tpu.vector_store %arg5[%c0_23, %c0_24], %60 {strides = array<i32>} : memref<8x128xf32, #tpu.memory_space<vmem>>, vector<8x128xf32>,
    return
  }
}

</mosaic_0001>

<llo_original>
// kernel: param_embed_forward.1
$region0: #{param_embed_forward.1}
  #allocation0 [shape = 'u32[]', space=smem, size = 0x4, offset = 0x4, fixed_abs, tag = 'smem constant byte address 0x4 - core index']
  #allocation1 [shape = 'u32[72,128]{1,0:T(1,128)}', space=vmem, size = 0x9000, scoped, tag = 'internal scratch']
  %s0 = inlined_call_operand.hbm [shape: f32[8,16], index: 0, kind: input, shape index: {}]
  %s1 = inlined_call_operand.hbm [shape: f32[16,128], index: 1, kind: input, shape index: {}]
  %s2 = inlined_call_operand.hbm [shape: f32[128,128], index: 2, kind: input, shape index: {}]
  %s3 = inlined_call_operand.hbm [shape: f32[128,128], index: 3, kind: input, shape index: {}]
  %s4 = inlined_call_operand.hbm [shape: f32[8,128], index: 4, kind: input, shape index: {}]
  %s5 = inlined_call_operand.hbm [shape: f32[8,128], index: 5, kind: output, shape index: {}]
  %s6 = sld [smem:[#allocation0]]
  $region50: #{param_embed_forward.1} parent=0
    _
  %s8 = ssub.s32 1, %s6
  %s9 = scalar_select 0, %s8, %s6
  $region1: #{param_embed_forward.1} parent=0
    #allocation2 [shape = 'u8[4096]{0}', space=vmem, size = 0x1000, scoped, tag = 'input window, operand 0, single buffered']
    #allocation3 [shape = 's32[1]{0}', space=sflag, size = 0x4, scoped, tag = 'scoped memory for param_embed_forward.1']
    #allocation4 [shape = 's32[1]{0}', space=sflag, size = 0x4, scoped, tag = 'scoped memory for param_embed_forward.1']
    #allocation5 [shape = 'u8[8192]{0}', space=vmem, size = 0x2000, scoped, tag = 'input window, operand 1, single buffered']
    #allocation6 [shape = 's32[1]{0}', space=sflag, size = 0x4, scoped, tag = 'scoped memory for param_embed_forward.1']
    #allocation7 [shape = 'u8[65536]{0}', space=vmem, size = 0x10000, scoped, tag = 'input window, operand 2, single buffered']
    #allocation8 [shape = 'u8[65536]{0}', space=vmem, size = 0x10000, scoped, tag = 'input window, operand 3, single buffered']
    #allocation9 [shape = 's32[1]{0}', space=sflag, size = 0x4, scoped, tag = 'scoped memory for param_embed_forward.1']
    #allocation10 [shape = 'u8[4096]{0}', space=vmem, size = 0x1000, scoped, tag = 'input window, operand 4, single buffered']
    #allocation11 [shape = 'u8[4096]{0}', space=vmem, size = 0x1000, scoped, tag = 'output window, operand 0, single buffered']
    %10 = vsyncpa [#allocation3], 0
    %11 = vsyncpa [#allocation6], 0
    %12 = vsyncpa [#allocation9], 0
    %13 = vsyncpa [#allocation4], 0
    // Predicated region
    $region2: #{param_embed_forward.1} parent=1 // pred_check
      _
    $region3: #{param_embed_forward.1} parent=1 // pred_check_branch
      %15 = sbr.rel (0) target = $region5
    $region4: #{param_embed_forward.1} parent=1 // pred_region
      %17 = vsyncadd [#allocation3], 0
      %s19 = sshll.u32 %s0, 4
      %s20 = int_to_ptr.hbm [resolvable:$true] %s19
      %s21 = sshll.u32 [#allocation2], 4
      %s22 = int_to_ptr.vmem [resolvable:$true] %s21
      %24 = dma.hbm_to_vmem [thread:$0]  %s20, 128, %s22, [#allocation3]
    $region5: #{param_embed_forward.1} parent=1 // pred_fallthru
      _
    // Predicated region
    $region6: #{param_embed_forward.1} parent=1 // pred_check
      _
    $region7: #{param_embed_forward.1} parent=1 // pred_check_branch
      %26 = sbr.rel (0) target = $region9
    $region8: #{param_embed_forward.1} parent=1 // pred_region
      %28 = vsyncadd [#allocation6], 0
      %s29 = sshll.u32 %s1, 4
      %s30 = int_to_ptr.hbm [resolvable:$true] %s29
      %s31 = sshll.u32 [#allocation5], 4
      %s32 = int_to_ptr.vmem [resolvable:$true] %s31
      %37 = dma.hbm_to_vmem [thread:$0]  %s30, 256, %s32, [#allocation6], 128, 128, 8
    $region9: #{param_embed_forward.1} parent=1 // pred_fallthru
      _
    // Predicated region
    $region10: #{param_embed_forward.1} parent=1 // pred_check
      _
    $region11: #{param_embed_forward.1} parent=1 // pred_check_branch
      %39 = sbr.rel (0) target = $region13
    $region12: #{param_embed_forward.1} parent=1 // pred_region
      %41 = vsyncadd [#allocation6], 0
      %s42 = sshll.u32 %s2, 4
      %s43 = int_to_ptr.hbm [resolvable:$true] %s42
      %s44 = sshll.u32 [#allocation7], 4
      %s45 = int_to_ptr.vmem [resolvable:$true] %s44
      %50 = dma.hbm_to_vmem [thread:$0]  %s43, 2048, %s45, [#allocation6], 128, 128, 8
    $region13: #{param_embed_forward.1} parent=1 // pred_fallthru
      _
    // Predicated region
    $region14: #{param_embed_forward.1} parent=1 // pred_check
      _
    $region15: #{param_embed_forward.1} parent=1 // pred_check_branch
      %52 = sbr.rel (0) target = $region17
    $region16: #{param_embed_forward.1} parent=1 // pred_region
      %54 = vsyncadd [#allocation9], 0
      %s55 = sshll.u32 %s3, 4
      %s56 = int_to_ptr.hbm [resolvable:$true] %s55
      %s57 = sshll.u32 [#allocation8], 4
      %s58 = int_to_ptr.vmem [resolvable:$true] %s57
      %63 = dma.hbm_to_vmem [thread:$0]  %s56, 2048, %s58, [#allocation9], 128, 128, 8
    $region17: #{param_embed_forward.1} parent=1 // pred_fallthru
      _
    // Predicated region
    $region18: #{param_embed_forward.1} parent=1 // pred_check
      _
    $region19: #{param_embed_forward.1} parent=1 // pred_check_branch
      %65 = sbr.rel (0) target = $region21
    $region20: #{param_embed_forward.1} parent=1 // pred_region
      %67 = vsyncadd [#allocation9], 0
      %s69 = sshll.u32 %s4, 4
      %s70 = int_to_ptr.hbm [resolvable:$true] %s69
      %s71 = sshll.u32 [#allocation10], 4
      %s72 = int_to_ptr.vmem [resolvable:$true] %s71
      %74 = dma.hbm_to_vmem [thread:$0]  %s70, 128, %s72, [#allocation9]
    $region21: #{param_embed_forward.1} parent=1 // pred_fallthru
      _
    // Predicated region
    $region22: #{param_embed_forward.1} parent=1 // pred_check
      _
    $region23: #{param_embed_forward.1} parent=1 // pred_check_branch
      %76 = sbr.rel (0) target = $region25
    $region24: #{param_embed_forward.1} parent=1 // pred_region
      %78 = dma.done [#allocation3], 128
    $region25: #{param_embed_forward.1} parent=1 // pred_fallthru
      _
    // Predicated region
    $region26: #{param_embed_forward.1} parent=1 // pred_check
      _
    $region27: #{param_embed_forward.1} parent=1 // pred_check_branch
      %80 = sbr.rel (0) target = $region29
    $region28: #{param_embed_forward.1} parent=1 // pred_region
      %82 = dma.done [#allocation6], 256
    $region29: #{param_embed_forward.1} parent=1 // pred_fallthru
      _
    // Predicated region
    $region30: #{param_embed_forward.1} parent=1 // pred_check
      _
    $region31: #{param_embed_forward.1} parent=1 // pred_check_branch
      %84 = sbr.rel (0) target = $region33
    $region32: #{param_embed_forward.1} parent=1 // pred_region
      %86 = dma.done [#allocation6], 2048
    $region33: #{param_embed_forward.1} parent=1 // pred_fallthru
      _
    // Predicated region
    $region34: #{param_embed_forward.1} parent=1 // pred_check
      _
    $region35: #{param_embed_forward.1} parent=1 // pred_check_branch
      %88 = sbr.rel (0) target = $region37
    $region36: #{param_embed_forward.1} parent=1 // pred_region
      %90 = dma.done [#allocation9], 2048
    $region37: #{param_embed_forward.1} parent=1 // pred_fallthru
      _
    // Predicated region
    $region38: #{param_embed_forward.1} parent=1 // pred_check
      _
    $region39: #{param_embed_forward.1} parent=1 // pred_check_branch
      %92 = sbr.rel (0) target = $region41
    $region40: #{param_embed_forward.1} parent=1 // pred_region
      %94 = dma.done [#allocation9], 128
    $region41: #{param_embed_forward.1} parent=1 // pred_fallthru
      _
    %v95 = vld [vmem:[#allocation2] sm:$0xff]
    %v96 = vld [vmem:[#allocation10] sm:$0xff]
    %v97 = vld [vmem:[#allocation5] sm:$0xff]
    %v98 = vld [vmem:[#allocation5 + $0x8] sm:$0xff]
    %vm99 = vcmask 130048
    %v101 = vsel %vm99, %v95, 0
    %103 = vmatpush.msra.mxu0 0.0
    %104 = vmatpush.msra.mxu0 0.0
    %105 = vmatpush.msra.mxu0 0.0
    %106 = vmatpush.msra.mxu0 0.0
    %107 = vmatpush.msra.mxu0 0.0
    %108 = vmatpush.msra.mxu0 0.0
    %109 = vmatpush.msra.mxu0 0.0
    %110 = vmatpush.msra.mxu0 0.0
    %111 = vmatpush.msra.mxu0 0.0
    %112 = vmatpush.msra.mxu0 0.0
    %113 = vmatpush.msra.mxu0 0.0
    %114 = vmatpush.msra.mxu0 0.0
    %115 = vmatpush.msra.mxu0 0.0
    %116 = vmatpush.msra.mxu0 0.0
    %117 = vmatpush.msra.mxu0 %v98
    %118 = vmatpush.msra.mxu0 %v97
    %119 = vmatmul.f32.gmra.mxu0 %v101
    %v120 = vpop.f32.mrf.mxu0
    %v121 = vadd.f32 0.0, %v120
    %122 = vdwg.mxu0
    %v123 = vrot.slane %v121, 4
    %v124 = vadd.f32 %v121, %v123
    %v125 = vrot.slane %v124, 2
    %v126 = vadd.f32 %v124, %v125
    %v127 = vrot.slane %v126, 1
    %v128 = vadd.f32 %v126, %v127
    %v129 = vrcp.pop 8.0
    %v130 = vmul.f32 8.0, %v129
    %v131 = vsub.f32 1.0, %v130
    %v132 = vmul.f32 %v129, %v131
    %v133 = vadd.f32 %v129, %v132
    %vm134 = vweird.f32 %v129
    %v135 = vsel %vm134, %v129, %v133
    %v136 = vmul.f32 %v128, %v135
    %v137 = vmul.f32 %v121, %v121
    %v138 = vrot.slane %v137, 4
    %v139 = vadd.f32 %v137, %v138
    %v140 = vrot.slane %v139, 2
    %v141 = vadd.f32 %v139, %v140
    %v142 = vrot.slane %v141, 1
    %v143 = vadd.f32 %v141, %v142
    %v144 = vmul.f32 %v143, %v135
    %v145 = vmul.f32 %v136, %v136
    %v146 = vsub.f32 %v144, %v145
    %v147 = vadd.f32 %v146, 1e-05
    %v148 = vrsqrt.pop %v147
    %v149 = vmul.f32 %v148, %v147
    %v150 = vmul.f32 %v149, %v148
    %v151 = vmul.f32 0.5, %v150
    %v152 = vsub.f32 1.5, %v151
    %v153 = vmul.f32 %v148, %v152
    %vm154 = vweird.f32 %v147
    %vm155 = vweird.f32 %v148
    %vm156 = vmor %vm154, %vm155
    %v157 = vsel %vm156, %v148, %v153
    %v158 = vmul.f32 %v96, %v157
    %v159 = vmul.f32 %v136, %v158
    %v161 = vrot.slane %v159, 7
    %v163 = vsub.f32 %v96, %v161
    %v164 = vperm.slane %v158, 0
    %v165 = vmul.f32 %v121, %v164
    %v166 = vperm.slane %v163, 1
    %v167 = vadd.f32 %v165, %v166
    %v168 = vmax.f32 %v167, 0.0
    %v169 = vld [vmem:[#allocation7] sm:$0xff]
    %v170 = vld [vmem:[#allocation7 + $0x8] sm:$0xff]
    %v171 = vld [vmem:[#allocation7 + $0x10] sm:$0xff]
    %v172 = vld [vmem:[#allocation7 + $0x18] sm:$0xff]
    %v173 = vld [vmem:[#allocation7 + $0x20] sm:$0xff]
    %v174 = vld [vmem:[#allocation7 + $0x28] sm:$0xff]
    %v175 = vld [vmem:[#allocation7 + $0x30] sm:$0xff]
    %v176 = vld [vmem:[#allocation7 + $0x38] sm:$0xff]
    %v177 = vld [vmem:[#allocation7 + $0x40] sm:$0xff]
    %v178 = vld [vmem:[#allocation7 + $0x48] sm:$0xff]
    %v179 = vld [vmem:[#allocation7 + $0x50] sm:$0xff]
    %v180 = vld [vmem:[#allocation7 + $0x58] sm:$0xff]
    %v181 = vld [vmem:[#allocation7 + $0x60] sm:$0xff]
    %v182 = vld [vmem:[#allocation7 + $0x68] sm:$0xff]
    %v183 = vld [vmem:[#allocation7 + $0x70] sm:$0xff]
    %v184 = vld [vmem:[#allocation7 + $0x78] sm:$0xff]
    %185 = vmatpush.msra.mxu0 %v184
    %186 = vmatpush.msra.mxu0 %v183
    %187 = vmatpush.msra.mxu0 %v182
    %188 = vmatpush.msra.mxu0 %v181
    %189 = vmatpush.msra.mxu0 %v180
    %190 = vmatpush.msra.mxu0 %v179
    %191 = vmatpush.msra.mxu0 %v178
    %192 = vmatpush.msra.mxu0 %v177
    %193 = vmatpush.msra.mxu0 %v176
    %194 = vmatpush.msra.mxu0 %v175
    %195 = vmatpush.msra.mxu0 %v174
    %196 = vmatpush.msra.mxu0 %v173
    %197 = vmatpush.msra.mxu0 %v172
    %198 = vmatpush.msra.mxu0 %v171
    %199 = vmatpush.msra.mxu0 %v170
    %200 = vmatpush.msra.mxu0 %v169
    %201 = vmatmul.f32.gmra.mxu0 %v168
    %v202 = vpop.f32.mrf.mxu0
    %v203 = vadd.f32 0.0, %v202
    %204 = vdwg.mxu0
    %v205 = vrot.slane %v203, 4
    %v206 = vadd.f32 %v203, %v205
    %v207 = vrot.slane %v206, 2
    %v208 = vadd.f32 %v206, %v207
    %v209 = vrot.slane %v208, 1
    %v210 = vadd.f32 %v208, %v209
    %v211 = vmul.f32 %v210, %v135
    %v212 = vmul.f32 %v203, %v203
    %v213 = vrot.slane %v212, 4
    %v214 = vadd.f32 %v212, %v213
    %v215 = vrot.slane %v214, 2
    %v216 = vadd.f32 %v214, %v215
    %v217 = vrot.slane %v216, 1
    %v218 = vadd.f32 %v216, %v217
    %v219 = vmul.f32 %v218, %v135
    %v220 = vmul.f32 %v211, %v211
    %v221 = vsub.f32 %v219, %v220
    %v222 = vadd.f32 %v221, 1e-05
    %v223 = vrsqrt.pop %v222
    %v224 = vmul.f32 %v223, %v222
    %v225 = vmul.f32 %v224, %v223
    %v226 = vmul.f32 0.5, %v225
    %v227 = vsub.f32 1.5, %v226
    %v228 = vmul.f32 %v223, %v227
    %vm229 = vweird.f32 %v222
    %vm230 = vweird.f32 %v223
    %vm231 = vmor %vm229, %vm230
    %v232 = vsel %vm231, %v223, %v228
    %v233 = vmul.f32 %v96, %v232
    %v234 = vmul.f32 %v211, %v233
    %v236 = vrot.slane %v234, 7
    %v238 = vsub.f32 %v96, %v236
    %v239 = vperm.slane %v233, 2
    %v240 = vmul.f32 %v203, %v239
    %v241 = vperm.slane %v238, 3
    %v242 = vadd.f32 %v240, %v241
    %v243 = vmax.f32 %v242, 0.0
    %v244 = vld [vmem:[#allocation8] sm:$0xff]
    %v245 = vld [vmem:[#allocation8 + $0x8] sm:$0xff]
    %v246 = vld [vmem:[#allocation8 + $0x10] sm:$0xff]
    %v247 = vld [vmem:[#allocation8 + $0x18] sm:$0xff]
    %v248 = vld [vmem:[#allocation8 + $0x20] sm:$0xff]
    %v249 = vld [vmem:[#allocation8 + $0x28] sm:$0xff]
    %v250 = vld [vmem:[#allocation8 + $0x30] sm:$0xff]
    %v251 = vld [vmem:[#allocation8 + $0x38] sm:$0xff]
    %v252 = vld [vmem:[#allocation8 + $0x40] sm:$0xff]
    %v253 = vld [vmem:[#allocation8 + $0x48] sm:$0xff]
    %v254 = vld [vmem:[#allocation8 + $0x50] sm:$0xff]
    %v255 = vld [vmem:[#allocation8 + $0x58] sm:$0xff]
    %v256 = vld [vmem:[#allocation8 + $0x60] sm:$0xff]
    %v257 = vld [vmem:[#allocation8 + $0x68] sm:$0xff]
    %v258 = vld [vmem:[#allocation8 + $0x70] sm:$0xff]
    %v259 = vld [vmem:[#allocation8 + $0x78] sm:$0xff]
    %v260 = vperm.slane %v96, 4
    %261 = vmatpush.msra.mxu0 %v259
    %262 = vmatpush.msra.mxu0 %v258
    %263 = vmatpush.msra.mxu0 %v257
    %264 = vmatpush.msra.mxu0 %v256
    %265 = vmatpush.msra.mxu0 %v255
    %266 = vmatpush.msra.mxu0 %v254
    %267 = vmatpush.msra.mxu0 %v253
    %268 = vmatpush.msra.mxu0 %v252
    %269 = vmatpush.msra.mxu0 %v251
    %270 = vmatpush.msra.mxu0 %v250
    %271 = vmatpush.msra.mxu0 %v249
    %272 = vmatpush.msra.mxu0 %v248
    %273 = vmatpush.msra.mxu0 %v247
    %274 = vmatpush.msra.mxu0 %v246
    %275 = vmatpush.msra.mxu0 %v245
    %276 = vmatpush.msra.mxu0 %v244
    %277 = vmatmul.f32.gmra.mxu0 %v243
    %v278 = vpop.f32.mrf.mxu0
    %v279 = vadd.f32 %v260, %v278
    %280 = vdwg.mxu0
    %281 = vst [vmem:[#allocation11] sm:$0xff] %v279
    // Predicated region
    $region42: #{param_embed_forward.1} parent=1 // pred_check
      _
    $region43: #{param_embed_forward.1} parent=1 // pred_check_branch
      %283 = sbr.rel (0) target = $region45
    $region44: #{param_embed_forward.1} parent=1 // pred_region
      %285 = vsyncadd [#allocation4], 0
      %s287 = sshll.u32 [#allocation11], 4
      %s288 = int_to_ptr.vmem [resolvable:$true] %s287
      %s289 = sshll.u32 %s5, 4
      %s290 = int_to_ptr.hbm [resolvable:$true] %s289
      %292 = dma.vmem_to_hbm [thread:$0]  %s288, 128, %s290, [#allocation4]
    $region45: #{param_embed_forward.1} parent=1 // pred_fallthru
      _
    // Predicated region
    $region46: #{param_embed_forward.1} parent=1 // pred_check
      _
    $region47: #{param_embed_forward.1} parent=1 // pred_check_branch
      %294 = sbr.rel (0) target = $region49
    $region48: #{param_embed_forward.1} parent=1 // pred_region
      %296 = dma.done [#allocation4], 128
    $region49: #{param_embed_forward.1} parent=1 // pred_fallthru
      _
    %297 = vsyncpa [#allocation3], 1
    %298 = vsyncpa [#allocation6], 1
    %299 = vsyncpa [#allocation9], 1
    %300 = vsyncpa [#allocation4], 1

</llo_original>
